<compile_context>
chip_gen: v6e
topology: v6e:2x2x1
jax: 0.10.0
libtpu: 0.0.40
codegen_flags: <defaults>
</compile_context>

<pallas_src>
import jax
import jax.numpy as jnp
from jax.experimental import pallas as pl
from jax.experimental.pallas import tpu as pltpu

_LANE = 128                 # vreg lane width
_SUBLANE_F32 = 8            # f32 sublanes per vreg
_MAX_SLAB_WIDTH = 16384     # cap on lane-dense slab width (elements)
_BLOCK_BYTES = 2 * 1024 * 1024  # ~2 MiB per block (x4 live buffers ~ 8 MiB VMEM)


def _flatten_copy_kernel(x_ref, o_ref):
    # Materialising copy (the `.contiguous()` part): one lane-dense tile copy.
    o_ref[...] = x_ref[...]


def _choose_slab(total: int, row_width: int, itemsize: int):
    """Pick a lane-dense 2D slab (rows, width) and rows-per-block for the copy."""
    packing = max(1, 4 // itemsize)        # 1 for f32, 2 for bf16, 4 for int8
    sub = _SUBLANE_F32 * packing           # sublane multiple for this dtype

    if total % _LANE == 0:
        # Largest power-of-two multiple of 128 dividing `total`, capped, and
        # preferring >= `sub` rows so each block is made of full (8,128) tiles.
        width = _LANE
        while (width * 2 <= _MAX_SLAB_WIDTH
               and total % (width * 2) == 0
               and total // (width * 2) >= sub):
            width *= 2
    else:
        # Fallback: keep the logical row width; a "full extent" last dim is
        # always a legal block shape (masked stores, correctness unaffected).
        width = row_width

    rows = total // width

    # Rows per block: multiple of `sub`, sized to ~_BLOCK_BYTES.
    rows_per_block = (_BLOCK_BYTES // max(1, width * itemsize)) // sub * sub
    rows_per_block = max(sub, rows_per_block)
    if rows_per_block >= rows:
        rows_per_block = rows              # single block (full dim is legal)
    return rows, width, rows_per_block


def flatten_pallas(x: jax.Array, num_neurons_flatten: int) -> jax.Array:
    """Equivalent of Flatten(num_neurons_flatten)(x): row-major flatten to 2D."""
    total = x.size
    rows_out = total // num_neurons_flatten
    assert rows_out * num_neurons_flatten == total, (
        "input size must be divisible by num_neurons_flatten"
    )

    itemsize = jnp.dtype(x.dtype).itemsize
    slab_rows, slab_w, rows_per_block = _choose_slab(
        total, num_neurons_flatten, itemsize
    )

    # Metadata-only regrouping into the lane-dense copy slab (the `.view` part).
    x_slab = jnp.reshape(x, (slab_rows, slab_w))

    num_blocks = pl.cdiv(slab_rows, rows_per_block)

    y_slab = pl.pallas_call(
        _flatten_copy_kernel,
        out_shape=jax.ShapeDtypeStruct((slab_rows, slab_w), x.dtype),
        grid=(num_blocks,),
        in_specs=[pl.BlockSpec((rows_per_block, slab_w), lambda i: (i, 0))],
        out_specs=pl.BlockSpec((rows_per_block, slab_w), lambda i: (i, 0)),
        compiler_params=pltpu.CompilerParams(
            dimension_semantics=("parallel",),
        ),
    )(x_slab)

    # Metadata-only regrouping back to the module's output shape.
    return jnp.reshape(y_slab, (rows_out, num_neurons_flatten))


if __name__ == "__main__":
    key = jax.random.PRNGKey(0)

    # Shapes consistent with the module's use in Lensiformer (per-sample
    # image-feature flatten): B=2, C=4, H=16, W=16 -> N = 1024.
    B, C, H, W = 2, 4, 16, 16
    num_neurons_flatten = C * H * W  # 1024
    x = jax.random.normal(key, (B, C, H, W), dtype=jnp.float32)

    y = flatten_pallas(x, num_neurons_flatten)
    y = jax.block_until_ready(y)
    y_ref = jnp.reshape(x, (-1, num_neurons_flatten))
    assert y.shape == (B, num_neurons_flatten), y.shape
    assert y.dtype == x.dtype
    assert bool(jnp.array_equal(y, y_ref))

    # Second small case exercising the non-128-multiple fallback path
    # (N = 300, total = 600): full-extent block, masked stores, still exact.
    B2, C2, H2, W2 = 2, 3, 10, 10
    n2 = C2 * H2 * W2  # 300
    x2 = jax.random.normal(jax.random.PRNGKey(1), (B2, C2, H2, W2),
                           dtype=jnp.float32)
    y2 = jax.block_until_ready(flatten_pallas(x2, n2))
    assert y2.shape == (B2, n2)
    assert bool(jnp.array_equal(y2, jnp.reshape(x2, (-1, n2))))

    print("KERNEL_OK")
</pallas_src>

<mosaic_0001>
module attributes {stable_mosaic.version = 11 : i64} {
  func.func @_flatten_copy_kernel(%arg0: i32, %arg1: memref<8x256xf32, #tpu.memory_space<vmem>>, %arg2: memref<8x256xf32, #tpu.memory_space<vmem>>) attributes {dimension_semantics = [#tpu.dimension_semantics<parallel>], iteration_bounds = array<i64: 1>, scalar_prefetch = 0 : i64, scratch_operands = 0 : i64, tpu.core_type = #tpu.core_type<tc>, window_params = [{transform_indices = @transform_0, window_bounds = array<i64: 8, 256>}, {transform_indices = @transform_1, window_bounds = array<i64: 8, 256>}]} {
    %c0 = arith.constant 0 : index
    %c0_0 = arith.constant 0 : index
    %0 = vector.load %arg1[%c0, %c0_0] : memref<8x256xf32, #tpu.memory_space<vmem>>, vector<8x256xf32>
    %c0_1 = arith.constant 0 : index
    %c0_2 = arith.constant 0 : index
    %1 = vector.load %arg2[%c0_1, %c0_2] : memref<8x256xf32, #tpu.memory_space<vmem>>, vector<8x256xf32>
    tpu.vector_store %arg2[%c0_1, %c0_2], %0 {strides = array<i32>} : memref<8x256xf32, #tpu.memory_space<vmem>>, vector<8x256xf32>,
    return
  }
  func.func @transform_0(%arg0: i32) -> (i32, i32) {
    %c0_i32 = arith.constant 0 : i32
    %c0_i32_0 = arith.constant 0 : i32
    return %arg0, %c0_i32 : i32, i32
  }
  func.func @transform_1(%arg0: i32) -> (i32, i32) {
    %c0_i32 = arith.constant 0 : i32
    %c0_i32_0 = arith.constant 0 : i32
    return %arg0, %c0_i32 : i32, i32
  }
}

</mosaic_0001>

<llo_original>
// kernel: tpu_custom_call.1
$region0: #{tpu_custom_call.1}
  #allocation0 [shape = 'u32[]', space=smem, size = 0x4, offset = 0x4, fixed_abs, tag = 'smem constant byte address 0x4 - core index']
  #allocation1 [shape = 'u32[144,128]{1,0:T(1,128)}', space=vmem, size = 0x12000, scoped, tag = 'internal scratch']
  %s0 = inlined_call_operand.hbm [shape: f32[8,256], index: 0, kind: input, shape index: {}]
  %s1 = inlined_call_operand.hbm [shape: f32[8,256], index: 1, kind: output, shape index: {}]
  %s2 = sld [smem:[#allocation0]]
  $region18: #{tpu_custom_call.1} parent=0
    _
  %s4 = ssub.s32 1, %s2
  %s5 = scalar_select 0, %s4, %s2
  $region1: #{tpu_custom_call.1} parent=0
    #allocation2 [shape = 'u8[8192]{0}', space=vmem, size = 0x2000, scoped, tag = 'input window, operand 0, single buffered']
    #allocation3 [shape = 's32[1]{0}', space=sflag, size = 0x4, scoped, tag = 'scoped memory for tpu_custom_call.1']
    #allocation4 [shape = 's32[1]{0}', space=sflag, size = 0x4, scoped, tag = 'scoped memory for tpu_custom_call.1']
    #allocation5 [shape = 'u8[8192]{0}', space=vmem, size = 0x2000, scoped, tag = 'output window, operand 0, single buffered']
    %6 = vsyncpa [#allocation3], 0
    %7 = vsyncpa [#allocation4], 0
    // Predicated region
    $region2: #{tpu_custom_call.1} parent=1 // pred_check
      _
    $region3: #{tpu_custom_call.1} parent=1 // pred_check_branch
      %9 = sbr.rel (0) target = $region5
    $region4: #{tpu_custom_call.1} parent=1 // pred_region
      %s11 = ssub.s32 256, 256
      %12 = vsyncadd [#allocation3], %s11
      %s14 = sshll.u32 [#allocation2], 4
      %s15 = int_to_ptr.vmem [resolvable:$true] %s14
      %17 = dma.hbm_to_vmem [thread:$0]  %s0, 256, %s15, [#allocation3]
    $region5: #{tpu_custom_call.1} parent=1 // pred_fallthru
      _
    // Predicated region
    $region6: #{tpu_custom_call.1} parent=1 // pred_check
      _
    $region7: #{tpu_custom_call.1} parent=1 // pred_check_branch
      %19 = sbr.rel (0) target = $region9
    $region8: #{tpu_custom_call.1} parent=1 // pred_region
      %20 = dma.done [#allocation3], 256
    $region9: #{tpu_custom_call.1} parent=1 // pred_fallthru
      _
    %v21 = vld [vmem:[#allocation2] sm:$0xff]
    %v22 = vld [vmem:[#allocation2 + $0x8] sm:$0xff]
    %23 = vst [vmem:[#allocation5] sm:$0xff] %v21
    %24 = vst [vmem:[#allocation5 + $0x8] sm:$0xff] %v22
    // Predicated region
    $region10: #{tpu_custom_call.1} parent=1 // pred_check
      _
    $region11: #{tpu_custom_call.1} parent=1 // pred_check_branch
      %26 = sbr.rel (0) target = $region13
    $region12: #{tpu_custom_call.1} parent=1 // pred_region
      %s28 = ssub.s32 256, 256
      %29 = vsyncadd [#allocation4], %s28
      %s31 = sshll.u32 [#allocation5], 4
      %s32 = int_to_ptr.vmem [resolvable:$true] %s31
      %34 = dma.vmem_to_hbm [thread:$0]  %s32, 256, %s1, [#allocation4]
    $region13: #{tpu_custom_call.1} parent=1 // pred_fallthru
      _
    // Predicated region
    $region14: #{tpu_custom_call.1} parent=1 // pred_check
      _
    $region15: #{tpu_custom_call.1} parent=1 // pred_check_branch
      %36 = sbr.rel (0) target = $region17
    $region16: #{tpu_custom_call.1} parent=1 // pred_region
      %37 = dma.done [#allocation4], 256
    $region17: #{tpu_custom_call.1} parent=1 // pred_fallthru
      _
    %38 = vsyncpa [#allocation3], 1
    %39 = vsyncpa [#allocation4], 1

</llo_original>
